<compile_context>
chip_gen: v7x
topology: tpu7x:2x2x1
jax: 0.10.0
libtpu: 0.0.40
codegen_flags: <defaults>
</compile_context>

<pallas_src>
import jax
import jax.numpy as jnp
from jax import lax
from jax.experimental import pallas as pl
from jax.experimental.pallas import tpu as pltpu


def _round_up(x, m):
    return ((x + m - 1) // m) * m


def _linear_nobias_kernel(x_ref, w_ref, o_ref, acc_ref):
    """Compute one (tm, tn) output tile, accumulating over the K grid axis.

    x_ref : (tm, tk) activation tile
    w_ref : (tn, tk) weight tile in PyTorch nn.Linear layout (out, in); the
            transpose is folded into dot_general -> no HBM transpose op.
    o_ref : (tm, tn) output tile
    acc_ref: (tm, tn) f32 VMEM accumulator, resident across the K axis.
    """
    @pl.when(pl.program_id(2) == 0)
    def _():
        acc_ref[...] = jnp.zeros_like(acc_ref)

    # out += x @ w.T : contract x dim 1 with w dim 1 on the MXU, f32 accumulate.
    acc_ref[...] += lax.dot_general(
        x_ref[...],
        w_ref[...],
        dimension_numbers=(((1,), (1,)), ((), ())),
        preferred_element_type=jnp.float32,
    )

    @pl.when(pl.program_id(2) == pl.num_programs(2) - 1)
    def _():
        # Cast fused in-kernel (no-op for f32; keeps bf16 writeback half-width
        # if the output dtype is ever narrowed).
        o_ref[...] = acc_ref[...].astype(o_ref.dtype)


def clip_2fc_forward(x, w, *, tm_max=256, tn_max=256, tk_max=512):
    """Pallas equivalent of clip_2fc.forward: out = x @ W.T (no bias).

    x: (batch, input_dim) float32
    w: (output_dim, input_dim) float32 -- PyTorch nn.Linear weight layout,
       used as-is (transpose folded into the kernel, no per-call HBM w.T).
    returns: (batch, output_dim) float32
    """
    batch, input_dim = x.shape
    output_dim, input_dim_w = w.shape
    assert input_dim == input_dim_w

    # Hardware-aligned, shape-adaptive tile sizes:
    #   second-last dims -> multiples of 8 (sublanes)
    #   last dims        -> multiples of 128 (lanes)  => unmasked, dense stores
    tm = min(tm_max, _round_up(batch, 8))
    tn = min(tn_max, _round_up(output_dim, 128))
    tk = min(tk_max, _round_up(input_dim, 128))

    mp = _round_up(batch, tm)
    np_ = _round_up(output_dim, tn)
    kp = _round_up(input_dim, tk)

    # Zero-pad once in the wrapper so the grid divides evenly; zero K-padding
    # does not change the dot product, M/N padding is sliced off afterwards.
    xp = x
    if mp != batch or kp != input_dim:
        xp = jnp.pad(x, ((0, mp - batch), (0, kp - input_dim)))
    wp = w
    if np_ != output_dim or kp != input_dim:
        wp = jnp.pad(w, ((0, np_ - output_dim), (0, kp - input_dim)))

    grid = (mp // tm, np_ // tn, kp // tk)

    flops = 2 * mp * np_ * kp
    bytes_accessed = 4 * (mp * kp + np_ * kp + mp * np_)

    out_padded = pl.pallas_call(
        _linear_nobias_kernel,
        out_shape=jax.ShapeDtypeStruct((mp, np_), x.dtype),
        grid=grid,
        in_specs=[
            pl.BlockSpec((tm, tk), lambda i, j, k: (i, k)),   # x tile
            pl.BlockSpec((tn, tk), lambda i, j, k: (j, k)),   # w tile (out, in)
        ],
        out_specs=pl.BlockSpec((tm, tn), lambda i, j, k: (i, j)),
        scratch_shapes=[pltpu.VMEM((tm, tn), jnp.float32)],
        compiler_params=pltpu.CompilerParams(
            # M/N independent (sharded across TensorCores on v7x),
            # K is the reduction axis and stays last / arbitrary.
            dimension_semantics=("parallel", "parallel", "arbitrary"),
        ),
        cost_estimate=pl.CostEstimate(
            flops=flops, transcendentals=0, bytes_accessed=bytes_accessed),
    )(xp, wp)

    if mp == batch and np_ == output_dim:
        return out_padded
    return out_padded[:batch, :output_dim]


if __name__ == "__main__":
    # Small shapes consistent with the module.
    batch = 8
    input_dim = 32
    hidden_dim = 32   # unused by forward (fc2 is never called)
    output_dim = 16

    key = jax.random.PRNGKey(0)
    kx, kw = jax.random.split(key)

    x = jax.random.normal(kx, (batch, input_dim), dtype=jnp.float32)

    # Deterministic init mimicking nn.Linear's U(-1/sqrt(fan_in), 1/sqrt(fan_in));
    # weight kept in PyTorch layout (output_dim, input_dim).
    bound = 1.0 / (input_dim ** 0.5)
    fc1_weight = jax.random.uniform(
        kw, (output_dim, input_dim), dtype=jnp.float32,
        minval=-bound, maxval=bound,
    )

    fwd = jax.jit(clip_2fc_forward)
    out = jax.block_until_ready(fwd(x, fc1_weight))

    # Cross-check against plain-JAX reference of the same math.
    ref = x @ fc1_weight.T
    assert out.shape == (batch, output_dim)
    assert jnp.allclose(out, ref, atol=1e-5, rtol=1e-5)

    print("KERNEL_OK")
</pallas_src>

<mosaic_0001>
module attributes {stable_mosaic.version = 11 : i64} {
  func.func @_linear_nobias_kernel(%arg0: i32, %arg1: i32, %arg2: i32, %arg3: memref<8x128xf32, #tpu.memory_space<vmem>>, %arg4: memref<128x128xf32, #tpu.memory_space<vmem>>, %arg5: memref<8x128xf32, #tpu.memory_space<vmem>>, %arg6: memref<8x128xf32, #tpu.memory_space<vmem>>) attributes {dimension_semantics = [#tpu.dimension_semantics<parallel>, #tpu.dimension_semantics<parallel>, #tpu.dimension_semantics<arbitrary>], iteration_bounds = array<i64: 1, 1, 1>, scalar_prefetch = 0 : i64, scratch_operands = 1 : i64, tpu.core_type = #tpu.core_type<tc>, window_params = [{transform_indices = @transform_0, window_bounds = array<i64: 8, 128>}, {transform_indices = @transform_1, window_bounds = array<i64: 128, 128>}, {transform_indices = @transform_2, window_bounds = array<i64: 8, 128>}]} {
    %c0_i32 = arith.constant 0 : i32
    %0 = arith.cmpi eq, %arg2, %c0_i32 : i32
    %1 = arith.extui %0 : i1 to i32
    %c0_i32_0 = arith.constant 0 : i32
    %2 = arith.cmpi ne, %1, %c0_i32_0 : i32
    scf.if %2 {
      %cst_10 = arith.constant 0.000000e+00 : f32
      %12 = vector.broadcast %cst_10 : f32 to vector<8x128xf32>
      %c0_11 = arith.constant 0 : index
      %c0_12 = arith.constant 0 : index
      %13 = vector.load %arg6[%c0_11, %c0_12] : memref<8x128xf32, #tpu.memory_space<vmem>>, vector<8x128xf32>
      tpu.vector_store %arg6[%c0_11, %c0_12], %12 {strides = array<i32>} : memref<8x128xf32, #tpu.memory_space<vmem>>, vector<8x128xf32>,
    } else {
    }
    %c0 = arith.constant 0 : index
    %c0_1 = arith.constant 0 : index
    %3 = vector.load %arg6[%c0, %c0_1] : memref<8x128xf32, #tpu.memory_space<vmem>>, vector<8x128xf32>
    %c0_2 = arith.constant 0 : index
    %c0_3 = arith.constant 0 : index
    %4 = vector.load %arg3[%c0_2, %c0_3] : memref<8x128xf32, #tpu.memory_space<vmem>>, vector<8x128xf32>
    %c0_4 = arith.constant 0 : index
    %c0_5 = arith.constant 0 : index
    %5 = vector.load %arg4[%c0_4, %c0_5] : memref<128x128xf32, #tpu.memory_space<vmem>>, vector<128x128xf32>
    %cst = arith.constant dense<0.000000e+00> : vector<8x128xf32>
    %6 = tpu.matmul %4, %5, %cst {dimension_numbers = #tpu.dot_dimension_numbers<[1], [1], [0], [0], [0, 0, 1, 0], [], []>} : vector<8x128xf32>, vector<128x128xf32>, vector<8x128xf32> -> vector<8x128xf32>
    %7 = arith.addf %3, %6 : vector<8x128xf32>
    %c0_6 = arith.constant 0 : index
    %c0_7 = arith.constant 0 : index
    %8 = vector.load %arg6[%c0_6, %c0_7] : memref<8x128xf32, #tpu.memory_space<vmem>>, vector<8x128xf32>
    tpu.vector_store %arg6[%c0_6, %c0_7], %7 {strides = array<i32>} : memref<8x128xf32, #tpu.memory_space<vmem>>, vector<8x128xf32>,
    %c0_i32_8 = arith.constant 0 : i32
    %9 = arith.cmpi eq, %arg2, %c0_i32_8 : i32
    %10 = arith.extui %9 : i1 to i32
    %c0_i32_9 = arith.constant 0 : i32
    %11 = arith.cmpi ne, %10, %c0_i32_9 : i32
    scf.if %11 {
      %c0_10 = arith.constant 0 : index
      %c0_11 = arith.constant 0 : index
      %12 = vector.load %arg6[%c0_10, %c0_11] : memref<8x128xf32, #tpu.memory_space<vmem>>, vector<8x128xf32>
      %c0_12 = arith.constant 0 : index
      %c0_13 = arith.constant 0 : index
      %13 = vector.load %arg5[%c0_12, %c0_13] : memref<8x128xf32, #tpu.memory_space<vmem>>, vector<8x128xf32>
      tpu.vector_store %arg5[%c0_12, %c0_13], %12 {strides = array<i32>} : memref<8x128xf32, #tpu.memory_space<vmem>>, vector<8x128xf32>,
    } else {
    }
    return
  }
  func.func @transform_0(%arg0: i32, %arg1: i32, %arg2: i32) -> (i32, i32) {
    %c0_i32 = arith.constant 0 : i32
    return %arg0, %arg2 : i32, i32
  }
  func.func @transform_1(%arg0: i32, %arg1: i32, %arg2: i32) -> (i32, i32) {
    %c0_i32 = arith.constant 0 : i32
    return %arg1, %arg2 : i32, i32
  }
  func.func @transform_2(%arg0: i32, %arg1: i32, %arg2: i32) -> (i32, i32) {
    %c0_i32 = arith.constant 0 : i32
    return %arg0, %arg1 : i32, i32
  }
}

</mosaic_0001>

<llo_original>
// kernel: clip_2fc_forward.1
$region0: #{clip_2fc_forward.1}
  #allocation0 [shape = 'u32[]', space=smem, size = 0x4, offset = 0x4, fixed_abs, tag = 'smem constant byte address 0x4 - core index']
  #allocation1 [shape = 'u32[144,128]{1,0:T(1,128)}', space=vmem, size = 0x12000, scoped, tag = 'internal scratch']
  #allocation2 [shape = 'f32[8,128]{1,0:T(8,128)}', space=vmem, size = 0x1000, scoped, tag = 'scratch operand']
  %s0 = inlined_call_operand.vmem [shape: f32[8,128], index: 0, kind: input, shape index: {}]
  %s1 = inlined_call_operand.vmem [shape: f32[128,128], index: 1, kind: input, shape index: {}]
  %s2 = inlined_call_operand.hbm [shape: f32[8,128], index: 2, kind: output, shape index: {}]
  %s3 = sld [smem:[#allocation0]]
  $region26: #{clip_2fc_forward.1} parent=0
    _
  %s5 = ssub.s32 1, %s3
  %s6 = scalar_select 0, %s5, %s3
  $region1: #{clip_2fc_forward.1} parent=0
    #allocation3 [shape = 'u8[4096]{0}', space=vmem, size = 0x1000, scoped, tag = 'output window, operand 0, single buffered']
    #allocation4 [shape = 's32[1]{0}', space=sflag, size = 0x4, scoped, tag = 'scoped memory for clip_2fc_forward.1']
    %7 = vsyncpa [#allocation4], 0
    // Predicated region
    $region2: #{clip_2fc_forward.1} parent=1 // pred_check
      _
    $region3: #{clip_2fc_forward.1} parent=1 // pred_check_branch
      %9 = sbr.rel (0) target = $region5
    $region4: #{clip_2fc_forward.1} parent=1 // pred_region
      _
    $region5: #{clip_2fc_forward.1} parent=1 // pred_fallthru
      _
    // Predicated region
    $region6: #{clip_2fc_forward.1} parent=1 // pred_check
      _
    $region7: #{clip_2fc_forward.1} parent=1 // pred_check_branch
      %11 = sbr.rel (0) target = $region9
    $region8: #{clip_2fc_forward.1} parent=1 // pred_region
      _
    $region9: #{clip_2fc_forward.1} parent=1 // pred_fallthru
      _
    %p12 = scmp.eq.s32.totalorder 0, 0
    // Predicated region
    $region10: #{clip_2fc_forward.1} parent=1 // pred_check
      %p13 = pneg %p12
    $region11: #{clip_2fc_forward.1} parent=1 // pred_check_branch
      %15 = sbr.rel (%p13) target = $region13
    $region12: #{clip_2fc_forward.1} parent=1 // pred_region
      %16 = vst [vmem:[#allocation2] sm:$0xff] 0.0
    $region13: #{clip_2fc_forward.1} parent=1 // pred_fallthru
      _
    %v17 = vld [vmem:[#allocation2] sm:$0xff]
    %v18 = vld [vmem:[%s0] sm:$0xff]
    %v19 = vld [vmem:[%s1] sm:$0xff]
    %v20 = vld [vmem:[%s1 + $0x8] sm:$0xff]
    %v21 = vld [vmem:[%s1 + $0x10] sm:$0xff]
    %v22 = vld [vmem:[%s1 + $0x18] sm:$0xff]
    %v23 = vld [vmem:[%s1 + $0x20] sm:$0xff]
    %v24 = vld [vmem:[%s1 + $0x28] sm:$0xff]
    %v25 = vld [vmem:[%s1 + $0x30] sm:$0xff]
    %v26 = vld [vmem:[%s1 + $0x38] sm:$0xff]
    %v27 = vld [vmem:[%s1 + $0x40] sm:$0xff]
    %v28 = vld [vmem:[%s1 + $0x48] sm:$0xff]
    %v29 = vld [vmem:[%s1 + $0x50] sm:$0xff]
    %v30 = vld [vmem:[%s1 + $0x58] sm:$0xff]
    %v31 = vld [vmem:[%s1 + $0x60] sm:$0xff]
    %v32 = vld [vmem:[%s1 + $0x68] sm:$0xff]
    %v33 = vld [vmem:[%s1 + $0x70] sm:$0xff]
    %v34 = vld [vmem:[%s1 + $0x78] sm:$0xff]
    %35 = vmatprep.subr.mxu0 0.0
    %36 = vmatpush1.xpose.msra.mxu0 %v19
    %37 = vmatprep.subr.mxu0 0.0
    %38 = vmatpush1.xpose.msra.mxu0 %v20
    %39 = vmatprep.subr.mxu0 0.0
    %40 = vmatpush1.xpose.msra.mxu0 %v21
    %41 = vmatprep.subr.mxu0 0.0
    %42 = vmatpush1.xpose.msra.mxu0 %v22
    %43 = vmatprep.subr.mxu0 0.0
    %44 = vmatpush1.xpose.msra.mxu0 %v23
    %45 = vmatprep.subr.mxu0 0.0
    %46 = vmatpush1.xpose.msra.mxu0 %v24
    %47 = vmatprep.subr.mxu0 0.0
    %48 = vmatpush1.xpose.msra.mxu0 %v25
    %49 = vmatprep.subr.mxu0 0.0
    %50 = vmatpush1.xpose.msra.mxu0 %v26
    %51 = vmatprep.subr.mxu0 0.0
    %52 = vmatpush1.xpose.msra.mxu0 %v27
    %53 = vmatprep.subr.mxu0 0.0
    %54 = vmatpush1.xpose.msra.mxu0 %v28
    %55 = vmatprep.subr.mxu0 0.0
    %56 = vmatpush1.xpose.msra.mxu0 %v29
    %57 = vmatprep.subr.mxu0 0.0
    %58 = vmatpush1.xpose.msra.mxu0 %v30
    %59 = vmatprep.subr.mxu0 0.0
    %60 = vmatpush1.xpose.msra.mxu0 %v31
    %61 = vmatprep.subr.mxu0 0.0
    %62 = vmatpush1.xpose.msra.mxu0 %v32
    %63 = vmatprep.subr.mxu0 0.0
    %64 = vmatpush1.xpose.msra.mxu0 %v33
    %65 = vmatprep.subr.mxu0 0.0
    %66 = vmatpush1.xpose.msra.mxu0 %v34
    %67 = vmatprep.subr.mxu0 0.0
    %68 = vmatpush1.xpose.msra.mxu0 0.0
    %69 = vmatprep.subr.mxu0 0.0
    %70 = vmatpush1.xpose.msra.mxu0 0.0
    %71 = vmatprep.subr.mxu0 0.0
    %72 = vmatpush1.xpose.msra.mxu0 0.0
    %73 = vmatprep.subr.mxu0 0.0
    %74 = vmatpush1.xpose.msra.mxu0 0.0
    %75 = vmatprep.subr.mxu0 0.0
    %76 = vmatpush1.xpose.msra.mxu0 0.0
    %77 = vmatprep.subr.mxu0 0.0
    %78 = vmatpush1.xpose.msra.mxu0 0.0
    %79 = vmatprep.subr.mxu0 0.0
    %80 = vmatpush1.xpose.msra.mxu0 0.0
    %81 = vmatprep.subr.mxu0 0.0
    %82 = vmatpush1.xpose.msra.mxu0 0.0
    %83 = vmatprep.subr.mxu0 0.0
    %84 = vmatpush1.xpose.msra.mxu0 0.0
    %85 = vmatprep.subr.mxu0 0.0
    %86 = vmatpush1.xpose.msra.mxu0 0.0
    %87 = vmatprep.subr.mxu0 0.0
    %88 = vmatpush1.xpose.msra.mxu0 0.0
    %89 = vmatprep.subr.mxu0 0.0
    %90 = vmatpush1.xpose.msra.mxu0 0.0
    %91 = vmatprep.subr.mxu0 0.0
    %92 = vmatpush1.xpose.msra.mxu0 0.0
    %93 = vmatprep.subr.mxu0 0.0
    %94 = vmatpush1.xpose.msra.mxu0 0.0
    %95 = vmatprep.subr.mxu0 0.0
    %96 = vmatpush1.xpose.msra.mxu0 0.0
    %97 = vmatprep.subr.mxu0 0.0
    %98 = vmatpush1.xpose.msra.mxu0 0.0
    %99 = vmatprep.mubr.f32.mxu0 0.0
    %100 = vmatmul.mubr.f32.gmra.mrb[0].mxu0 %v18
    %v101 = vpop.f32.mrb[0].mxu0
    %v102 = vadd.f32 0.0, %v101
    %v103 = vpop.f32.mrb[0].mxu0
    %104 = vdwg.mxu0
    %v105 = vadd.f32 %v17, %v102
    %106 = vst [vmem:[#allocation2] sm:$0xff] %v105
    // Predicated region
    $region14: #{clip_2fc_forward.1} parent=1 // pred_check
      %p107 = pneg %p12
    $region15: #{clip_2fc_forward.1} parent=1 // pred_check_branch
      %109 = sbr.rel (%p107) target = $region17
    $region16: #{clip_2fc_forward.1} parent=1 // pred_region
      %v110 = vld [vmem:[#allocation2] sm:$0xff]
      %111 = vst [vmem:[#allocation3] sm:$0xff] %v110
    $region17: #{clip_2fc_forward.1} parent=1 // pred_fallthru
      _
    // Predicated region
    $region18: #{clip_2fc_forward.1} parent=1 // pred_check
      _
    $region19: #{clip_2fc_forward.1} parent=1 // pred_check_branch
      %113 = sbr.rel (0) target = $region21
    $region20: #{clip_2fc_forward.1} parent=1 // pred_region
      %s115 = ssub.s32 128, 128
      %116 = vsyncadd [#allocation4], %s115
      %s118 = sshll.u32 [#allocation3], 4
      %s119 = int_to_ptr.vmem [resolvable:$true] %s118
      %121 = dma.vmem_to_hbm [thread:$0]  %s119, 128, %s2, [#allocation4]
    $region21: #{clip_2fc_forward.1} parent=1 // pred_fallthru
      _
    // Predicated region
    $region22: #{clip_2fc_forward.1} parent=1 // pred_check
      _
    $region23: #{clip_2fc_forward.1} parent=1 // pred_check_branch
      %123 = sbr.rel (0) target = $region25
    $region24: #{clip_2fc_forward.1} parent=1 // pred_region
      %124 = dma.done [#allocation4], 128
    $region25: #{clip_2fc_forward.1} parent=1 // pred_fallthru
      _
    %125 = vsyncpa [#allocation4], 1

</llo_original>
